<compile_context>
chip_gen: v6e
topology: v6e:2x2x1
jax: 0.10.0
libtpu: 0.0.40
codegen_flags: <defaults>
</compile_context>

<pallas_src>
import functools
import math

import jax
import jax.numpy as jnp
from jax.experimental import pallas as pl
from jax.experimental.pallas import tpu as pltpu


def _lcm(a, b):
    return a * b // math.gcd(a, b)


def _pow_gamma(v, gamma):
    g = float(gamma)
    if g == 0.0:
        return jnp.ones_like(v)
    if g == 1.0:
        return v
    if g == 2.0:
        return v * v
    return jnp.power(v, jnp.float32(g))


def _focal_loss_kernel(a_pos_ref, a_neg_ref, pred_ref, tgt_ref, out_ref, *,
                       gamma, tile_rows, lane, approx_recip):
    x = pred_ref[...].astype(jnp.float32)       # (tile_rows, lane) logits
    t = tgt_ref[...].astype(jnp.float32)        # (tile_rows, lane) {0,1} targets
    tb = t != 0.0

    # Binary-target reformulation: with z = -x where t==1 else x,
    #   1 - p_t   = sigmoid(z)
    #   -log(p_t) = softplus(z)     (finite even for saturated logits)
    z = jnp.where(tb, -x, x)

    # One shared EUP exp feeds both softplus and sigmoid; the divide goes to
    # the (approximate) reciprocal instead of a second exp + full divide.
    e = jnp.exp(-jnp.abs(z))
    neg_log_p_t = jnp.maximum(z, 0.0) + jnp.log1p(e)

    # alpha_t = 1 - alpha where t==1, alpha where t==0
    # (matches the reference code: targets*(1-alpha) + (1-targets)*alpha).
    alpha_t = jnp.where(tb, a_pos_ref[...], a_neg_ref[...])

    g = float(gamma)
    if g == 0.0:
        loss = alpha_t * neg_log_p_t
    else:
        inv = pl.reciprocal(1.0 + e, approx=approx_recip)
        one_minus_pt = jnp.where(z >= 0.0, inv, e * inv)      # sigmoid(z)
        if g == 1.0:
            focal = one_minus_pt
        elif g == 2.0:
            focal = one_minus_pt * one_minus_pt
        else:
            focal = jnp.power(one_minus_pt, jnp.float32(g))
        loss = alpha_t * focal * neg_log_p_t

    # Per-tile partial sums: splitting the major axis into (tile_rows//8, 8)
    # keeps the reduce a pure vreg-wise VALU add tree (no cross-lane XLU
    # reduce inside the kernel); the tiny (8, lane) slab is reduced outside.
    out_ref[...] = jnp.sum(loss.reshape(tile_rows // 8, 8, lane), axis=0)


def _focal_tail_sum(x_flat, t_flat, alpha_vec, gamma):
    """Focal-loss sum over a flat tail whose length is a multiple of C."""
    C = alpha_vec.shape[0]
    x = x_flat.astype(jnp.float32)
    t = t_flat.astype(jnp.float32)
    a = jnp.tile(alpha_vec, x.shape[0] // C)
    tb = t != 0.0
    z = jnp.where(tb, -x, x)
    e = jnp.exp(-jnp.abs(z))
    neg_log_p_t = jnp.maximum(z, 0.0) + jnp.log1p(e)
    one_minus_pt = jax.nn.sigmoid(z)
    alpha_t = jnp.where(tb, 1.0 - a, a)
    return jnp.sum(alpha_t * _pow_gamma(one_minus_pt, gamma) * neg_log_p_t)


def focal_loss(predictions, targets, alpha, gamma=1.0, *,
               target_block_bytes=2 * 1024 * 1024,
               approx_reciprocal=True,
               vmem_limit_bytes=None):
    """Mean focal loss over all elements of (B, C) predictions / targets.

    Matches FocalLoss.forward for binary {0, 1} targets (the log-sigmoid
    reformulation used in the kernel is exact only in that case).
    """
    B, C = predictions.shape
    assert targets.shape == (B, C)
    n = B * C
    alpha_f32 = jnp.asarray(alpha, jnp.float32).reshape(C)

    item_p = jnp.dtype(predictions.dtype).itemsize
    item_t = jnp.dtype(targets.dtype).itemsize
    max_item = max(item_p, item_t)
    # Sublane multiple that respects packing of the narrowest input dtype:
    # 8 for 4-byte, 16 for 2-byte, 32 for 1-byte inputs.
    sub_mult = max(8, 32 // min(item_p, item_t))

    # Lane-dense flattening: LANE = lcm(C, 128) makes every flattened row see
    # the same class pattern (class = lane_idx % C) and keeps all loads/stores
    # fully lane-dense.  Guard the lcm blow-up (large C not dividing 128):
    # fall back to the natural (B, C) layout, whose lane waste is negligible
    # exactly when C is large.
    lane_flat = _lcm(C, 128)
    if lane_flat * 8 * max_item <= max(target_block_bytes, 1 << 20):
        lane = lane_flat
        rows_full = n // lane
    else:
        lane = C
        rows_full = B

    # Tile sizing against a VMEM budget.  Only FULL tiles go through Pallas;
    # the tail (< one tile of rows plus an optional sub-row remainder) is a
    # tiny jnp epilogue, so the kernel needs no masking and the wrapper never
    # pads or copies the full arrays.
    cap = max(sub_mult,
              (target_block_bytes // (lane * max_item)) // sub_mult * sub_mult)
    tile_rows = min(cap, (rows_full // sub_mult) * sub_mult)
    num_tiles = rows_full // tile_rows if tile_rows > 0 else 0
    rows_main = num_tiles * tile_rows
    n_main = rows_main * lane

    total = jnp.float32(0.0)

    if num_tiles > 0:
        # Zero-copy when n_main == n (aligned shapes); otherwise only a prefix
        # slice of the flat view — never a full-array pad.
        def main_view(a):
            flat = a.reshape(-1)
            if n_main != n:
                flat = flat[:n_main]
            return flat.reshape(rows_main, lane)

        pred2 = main_view(predictions)
        tgt2 = main_view(targets)

        reps = lane // C
        a_pos = jnp.tile(1.0 - alpha_f32, reps).reshape(1, lane)  # target == 1
        a_neg = jnp.tile(alpha_f32, reps).reshape(1, lane)        # target == 0

        block_bytes = tile_rows * lane * max_item
        if vmem_limit_bytes is None:
            # ~2 inputs x 2 pipeline buffers x block, plus small outputs/slack;
            # comfortably inside v7x's 64 MiB VMEM at the default block size.
            vmem_limit = int(min(100 * 2**20, 4 * block_bytes + 8 * 2**20))
        else:
            vmem_limit = int(vmem_limit_bytes)

        kernel = functools.partial(
            _focal_loss_kernel,
            gamma=float(gamma),
            tile_rows=tile_rows,
            lane=lane,
            approx_recip=bool(approx_reciprocal),
        )

        partials = pl.pallas_call(
            kernel,
            out_shape=jax.ShapeDtypeStruct((num_tiles * 8, lane), jnp.float32),
            grid_spec=pltpu.PrefetchScalarGridSpec(
                num_scalar_prefetch=0,
                grid=(num_tiles,),
                in_specs=[
                    pl.BlockSpec((1, lane), lambda i: (0, 0)),           # 1-alpha
                    pl.BlockSpec((1, lane), lambda i: (0, 0)),           # alpha
                    pl.BlockSpec((tile_rows, lane), lambda i: (i, 0)),   # logits
                    pl.BlockSpec((tile_rows, lane), lambda i: (i, 0)),   # targets
                ],
                out_specs=pl.BlockSpec((8, lane), lambda i: (i, 0)),     # partials
            ),
            compiler_params=pltpu.CompilerParams(
                dimension_semantics=("parallel",),
                vmem_limit_bytes=vmem_limit,
            ),
        )(a_pos, a_neg, pred2, tgt2)

        total = total + jnp.sum(partials)

    if n_main < n:
        # Tail epilogue: its length is a multiple of C, so the class pattern
        # restarts at class 0.
        pred_tail = predictions.reshape(-1)[n_main:]
        tgt_tail = targets.reshape(-1)[n_main:]
        total = total + _focal_tail_sum(pred_tail, tgt_tail, alpha_f32, gamma)

    return total / jnp.float32(n)


def _focal_loss_ref(predictions, targets, alpha, gamma=1.0):
    """Direct jnp transliteration of FocalLoss.forward."""
    p = jax.nn.sigmoid(predictions.astype(jnp.float32))
    t = targets.astype(jnp.float32)
    a = jnp.asarray(alpha, jnp.float32).reshape(1, -1)
    p_t = t * p + (1.0 - t) * (1.0 - p)
    alpha_t = t * (1.0 - a) + (1.0 - t) * a
    loss = -alpha_t * (1.0 - p_t) ** gamma * jnp.log(p_t)
    return loss.mean()


if __name__ == "__main__":
    root = jax.random.PRNGKey(0)
    k_case = jax.random.split(root, 4)

    def make_case(key, B, C, pred_dtype=jnp.float32, tgt_dtype=jnp.float32):
        k1, k2, k3 = jax.random.split(key, 3)
        preds = jax.random.normal(k1, (B, C), jnp.float32).astype(pred_dtype)
        tgts = jax.random.bernoulli(k2, 0.3, (B, C)).astype(tgt_dtype)
        alph = jax.random.uniform(k3, (C,), jnp.float32, minval=0.05, maxval=0.95)
        return preds, tgts, alph

    # 1) Small lane-aligned minibatch (64 x 16 = 8 lane-dense rows), gamma=1,
    #    jitted wrapper, default approximate-reciprocal path.
    preds, tgts, alpha = make_case(k_case[0], 64, 16)
    loss_fn = jax.jit(lambda p, t, a: focal_loss(p, t, a, gamma=1.0))
    out = jax.block_until_ready(loss_fn(preds, tgts, alpha))
    ref = _focal_loss_ref(preds, tgts, alpha, 1.0)
    assert jnp.allclose(out, ref, rtol=1e-3, atol=1e-6), (out, ref)

    # 2) Exact-reciprocal path, gamma=2, tight tolerance.
    out2 = jax.block_until_ready(
        focal_loss(preds, tgts, alpha, gamma=2.0, approx_reciprocal=False))
    ref2 = _focal_loss_ref(preds, tgts, alpha, 2.0)
    assert jnp.allclose(out2, ref2, rtol=1e-5, atol=1e-6), (out2, ref2)

    # 3) Ragged shape (77 x 16): kernel streams 8 full flattened rows, the jnp
    #    tail epilogue covers the remaining 208 elements.
    preds3, tgts3, alpha3 = make_case(k_case[1], 77, 16)
    out3 = jax.block_until_ready(focal_loss(preds3, tgts3, alpha3, gamma=1.0))
    ref3 = _focal_loss_ref(preds3, tgts3, alpha3, 1.0)
    assert jnp.allclose(out3, ref3, rtol=1e-3, atol=1e-6), (out3, ref3)

    # 4) C that does not divide 128 (lane = lcm(12, 128) = 384).
    preds4, tgts4, alpha4 = make_case(k_case[2], 256, 12)
    out4 = jax.block_until_ready(focal_loss(preds4, tgts4, alpha4, gamma=1.0))
    ref4 = _focal_loss_ref(preds4, tgts4, alpha4, 1.0)
    assert jnp.allclose(out4, ref4, rtol=1e-3, atol=1e-6), (out4, ref4)

    # 5) Narrow HBM dtypes (bf16 logits, int8 targets); kernel upcasts to f32.
    preds5, tgts5, alpha5 = make_case(k_case[3], 256, 16,
                                      pred_dtype=jnp.bfloat16,
                                      tgt_dtype=jnp.int8)
    out5 = jax.block_until_ready(focal_loss(preds5, tgts5, alpha5, gamma=1.0))
    ref5 = _focal_loss_ref(preds5, tgts5, alpha5, 1.0)
    assert jnp.allclose(out5, ref5, rtol=2e-3, atol=1e-6), (out5, ref5)

    print("KERNEL_OK")
</pallas_src>

<mosaic_0001>
module attributes {stable_mosaic.version = 11 : i64} {
  func.func @_focal_loss_kernel(%arg0: i32, %arg1: memref<1x128xf32, #tpu.memory_space<vmem>>, %arg2: memref<1x128xf32, #tpu.memory_space<vmem>>, %arg3: memref<8x128xf32, #tpu.memory_space<vmem>>, %arg4: memref<8x128xf32, #tpu.memory_space<vmem>>, %arg5: memref<8x128xf32, #tpu.memory_space<vmem>>) attributes {dimension_semantics = [#tpu.dimension_semantics<parallel>], iteration_bounds = array<i64: 1>, scalar_prefetch = 0 : i64, scratch_operands = 0 : i64, tpu.core_type = #tpu.core_type<tc>, window_params = [{pipeline_mode = #tpu.pipeline_mode<synchronous>, transform_indices = @transform_0, window_bounds = array<i64: 1, 128>}, {pipeline_mode = #tpu.pipeline_mode<synchronous>, transform_indices = @transform_1, window_bounds = array<i64: 1, 128>}, {transform_indices = @transform_2, window_bounds = array<i64: 8, 128>}, {transform_indices = @transform_3, window_bounds = array<i64: 8, 128>}, {transform_indices = @transform_4, window_bounds = array<i64: 8, 128>}]} {
    %c0 = arith.constant 0 : index
    %c0_0 = arith.constant 0 : index
    %0 = vector.load %arg3[%c0, %c0_0] : memref<8x128xf32, #tpu.memory_space<vmem>>, vector<8x128xf32>
    %c0_1 = arith.constant 0 : index
    %c0_2 = arith.constant 0 : index
    %1 = vector.load %arg4[%c0_1, %c0_2] : memref<8x128xf32, #tpu.memory_space<vmem>>, vector<8x128xf32>
    %cst = arith.constant 0.000000e+00 : f32
    %2 = vector.broadcast %cst : f32 to vector<8x128xf32>
    %3 = arith.cmpf one, %1, %2 : vector<8x128xf32>
    %cst_3 = arith.constant 0.000000e+00 : f32
    %4 = vector.broadcast %cst_3 : f32 to vector<8x128xf32>
    %5 = arith.subf %4, %0 : vector<8x128xf32>
    %6 = arith.select %3, %5, %0 : vector<8x128xi1>, vector<8x128xf32>
    %7 = math.absf %6 : vector<8x128xf32>
    %cst_4 = arith.constant 0.000000e+00 : f32
    %8 = vector.broadcast %cst_4 : f32 to vector<8x128xf32>
    %9 = arith.subf %8, %7 : vector<8x128xf32>
    %10 = math.exp %9 : vector<8x128xf32>
    %cst_5 = arith.constant 0.000000e+00 : f32
    %11 = vector.broadcast %cst_5 : f32 to vector<8x128xf32>
    %12 = arith.maximumf %6, %11 : vector<8x128xf32>
    %13 = math.log1p %10 : vector<8x128xf32>
    %14 = arith.addf %12, %13 : vector<8x128xf32>
    %c0_6 = arith.constant 0 : index
    %c0_7 = arith.constant 0 : index
    %15 = vector.load %arg1[%c0_6, %c0_7] : memref<1x128xf32, #tpu.memory_space<vmem>>, vector<1x128xf32>
    %c0_8 = arith.constant 0 : index
    %c0_9 = arith.constant 0 : index
    %16 = vector.load %arg2[%c0_8, %c0_9] : memref<1x128xf32, #tpu.memory_space<vmem>>, vector<1x128xf32>
    %17 = vector.shape_cast %15 : vector<1x128xf32> to vector<1x128xf32>
    %18 = vector.broadcast %17 : vector<1x128xf32> to vector<8x128xf32>
    %19 = vector.shape_cast %16 : vector<1x128xf32> to vector<1x128xf32>
    %20 = vector.broadcast %19 : vector<1x128xf32> to vector<8x128xf32>
    %21 = arith.select %3, %18, %20 : vector<8x128xi1>, vector<8x128xf32>
    %cst_10 = arith.constant 1.000000e+00 : f32
    %22 = vector.broadcast %cst_10 : f32 to vector<8x128xf32>
    %23 = arith.addf %22, %10 : vector<8x128xf32>
    %24 = tpu.reciprocal %23 {approx = true} : vector<8x128xf32> -> vector<8x128xf32>
    %cst_11 = arith.constant 0.000000e+00 : f32
    %25 = vector.broadcast %cst_11 : f32 to vector<8x128xf32>
    %26 = arith.cmpf oge, %6, %25 : vector<8x128xf32>
    %27 = arith.mulf %10, %24 : vector<8x128xf32>
    %28 = arith.select %26, %24, %27 : vector<8x128xi1>, vector<8x128xf32>
    %29 = arith.mulf %21, %28 : vector<8x128xf32>
    %30 = arith.mulf %29, %14 : vector<8x128xf32>
    %31 = vector.shape_cast %30 : vector<8x128xf32> to vector<1x8x128xf32>
    %cst_12 = arith.constant dense<0.000000e+00> : vector<8x128xf32>
    %32 = vector.multi_reduction <add>, %31, %cst_12 [0] : vector<1x8x128xf32> to vector<8x128xf32>
    %c0_13 = arith.constant 0 : index
    %c0_14 = arith.constant 0 : index
    %33 = vector.load %arg5[%c0_13, %c0_14] : memref<8x128xf32, #tpu.memory_space<vmem>>, vector<8x128xf32>
    tpu.vector_store %arg5[%c0_13, %c0_14], %32 {strides = array<i32>} : memref<8x128xf32, #tpu.memory_space<vmem>>, vector<8x128xf32>,
    return
  }
  func.func @transform_0(%arg0: i32) -> (i32, i32) {
    %c0_i32 = arith.constant 0 : i32
    %c0_i32_0 = arith.constant 0 : i32
    %c0_i32_1 = arith.constant 0 : i32
    return %c0_i32, %c0_i32_0 : i32, i32
  }
  func.func @transform_1(%arg0: i32) -> (i32, i32) {
    %c0_i32 = arith.constant 0 : i32
    %c0_i32_0 = arith.constant 0 : i32
    %c0_i32_1 = arith.constant 0 : i32
    return %c0_i32, %c0_i32_0 : i32, i32
  }
  func.func @transform_2(%arg0: i32) -> (i32, i32) {
    %c0_i32 = arith.constant 0 : i32
    %c0_i32_0 = arith.constant 0 : i32
    return %arg0, %c0_i32 : i32, i32
  }
  func.func @transform_3(%arg0: i32) -> (i32, i32) {
    %c0_i32 = arith.constant 0 : i32
    %c0_i32_0 = arith.constant 0 : i32
    return %arg0, %c0_i32 : i32, i32
  }
  func.func @transform_4(%arg0: i32) -> (i32, i32) {
    %c0_i32 = arith.constant 0 : i32
    %c0_i32_0 = arith.constant 0 : i32
    return %arg0, %c0_i32 : i32, i32
  }
}

</mosaic_0001>

<llo_original>
// kernel: tile.14
$region0: #{tile.14}
  %s0 = inlined_call_operand.vmem [shape: f32[8,16], index: 0, kind: input, shape index: {}]
  %s1 = inlined_call_operand.vmem [shape: f32[1,128], index: 1, kind: output, shape index: {}]
  $region1: #{tile.14} parent=0
    #allocation0 [shape = 'u8[4096]{0}', space=vmem, size = 0x1000, scoped, tag = 'scoped mem for output reshape']
    %v2 = vld [vmem:[%s0] sm:$0x1]
    %vm3 = vcmask 130048
    %4 = vst.msk [vmem:[#allocation0] sm:$0x1] %vm3, %v2
    %s5 = scalar_lea.vmem %s0, 7
    %v6 = vld [vmem:[%s5] sm:$0x1]
    %7 = vrot.lane.b32.xlu0 %v6, 112
    %v8 = vpop.permute.xlu0 %7
    %vm9 = vcmask 1048448
    %10 = vst.msk [vmem:[#allocation0] sm:$0x1] %vm9, %v8
    %s11 = scalar_lea.vmem %s0, 6
    %v12 = vld [vmem:[%s11] sm:$0x1]
    %13 = vrot.lane.b32.xlu0 %v12, 96
    %v14 = vpop.permute.xlu0 %13
    %vm15 = vcmask 917248
    %16 = vst.msk [vmem:[#allocation0] sm:$0x1] %vm15, %v14
    %s17 = scalar_lea.vmem %s0, 5
    %v18 = vld [vmem:[%s17] sm:$0x1]
    %19 = vrot.lane.b32.xlu0 %v18, 80
    %v20 = vpop.permute.xlu0 %19
    %vm21 = vcmask 786048
    %22 = vst.msk [vmem:[#allocation0] sm:$0x1] %vm21, %v20
    %s23 = scalar_lea.vmem %s0, 4
    %v24 = vld [vmem:[%s23] sm:$0x1]
    %25 = vrot.lane.b32.xlu0 %v24, 64
    %v26 = vpop.permute.xlu0 %25
    %vm27 = vcmask 654848
    %28 = vst.msk [vmem:[#allocation0] sm:$0x1] %vm27, %v26
    %s29 = scalar_lea.vmem %s0, 3
    %v30 = vld [vmem:[%s29] sm:$0x1]
    %31 = vrot.lane.b32.xlu0 %v30, 48
    %v32 = vpop.permute.xlu0 %31
    %vm33 = vcmask 523648
    %34 = vst.msk [vmem:[#allocation0] sm:$0x1] %vm33, %v32
    %s35 = scalar_lea.vmem %s0, 2
    %v36 = vld [vmem:[%s35] sm:$0x1]
    %37 = vrot.lane.b32.xlu0 %v36, 32
    %v38 = vpop.permute.xlu0 %37
    %vm39 = vcmask 392448
    %40 = vst.msk [vmem:[#allocation0] sm:$0x1] %vm39, %v38
    %s41 = scalar_lea.vmem %s0, 1
    %v42 = vld [vmem:[%s41] sm:$0x1]
    %43 = vrot.lane.b32.xlu0 %v42, 16
    %v44 = vpop.permute.xlu0 %43
    %vm45 = vcmask 261248
    %46 = vst.msk [vmem:[#allocation0] sm:$0x1] %vm45, %v44
    %s48 = sshll.u32 1, 1
    %s49 = ssub.s32 %s48, 1
    %v51 = vld [vmem:[#allocation0] sm:%s49]
    %s52 = sshll.u32 1, 1
    %s53 = ssub.s32 %s52, 1
    %54 = vst [vmem:[%s1] sm:%s53] %v51

// kernel: tile.13
$region0: #{tile.13}
  #allocation0 [shape = 's32[1]{0}', space=sflag, size = 0x4, scoped, tag = 'scoped memory for tile.13']
  %s0 = inlined_call_operand.vmem [shape: f32[16], index: 0, kind: input, shape index: {}]
  %s1 = inlined_call_operand.vmem [shape: f32[8,16], index: 1, kind: output, shape index: {}]
  // Predicated region
  $region2: #{tile.13} parent=0 // pred_check
    _
  $region3: #{tile.13} parent=0 // pred_check_branch
    %3 = sbr.rel (0) target = $region5
  $region4: #{tile.13} parent=0 // pred_region
    _
  $region5: #{tile.13} parent=0 // pred_fallthru
    _
  %v4 = vld [vmem:[%s0] ss:$0 sm:$0xff]
  %5 = vst [vmem:[%s1] sm:$0xff] %v4

// kernel: _lambda_.1
$region0: #{_lambda_.1}
  #allocation0 [shape = 'u32[]', space=smem, size = 0x4, offset = 0x4, fixed_abs, tag = 'smem constant byte address 0x4 - core index']
  #allocation1 [shape = 'u32[144,128]{1,0:T(1,128)}', space=vmem, size = 0x12000, scoped, tag = 'internal scratch']
  %s0 = inlined_call_operand.vmem [shape: f32[1,128], index: 0, kind: input, shape index: {}]
  %s1 = inlined_call_operand.vmem [shape: f32[1,128], index: 1, kind: input, shape index: {}]
  %s2 = inlined_call_operand.vmem [shape: f32[8,128], index: 2, kind: input, shape index: {}]
  %s3 = inlined_call_operand.vmem [shape: f32[8,128], index: 3, kind: input, shape index: {}]
  %s4 = inlined_call_operand.vmem [shape: f32[8,128], index: 4, kind: output, shape index: {}]
  %s5 = sld [smem:[#allocation0]]
  $region26: #{_lambda_.1} parent=0
    _
  %s7 = ssub.s32 1, %s5
  %s8 = scalar_select 0, %s7, %s5
  // Predicated region
  $region2: #{_lambda_.1} parent=0 // pred_check
    _
  $region3: #{_lambda_.1} parent=0 // pred_check_branch
    %10 = sbr.rel (0) target = $region5
  $region4: #{_lambda_.1} parent=0 // pred_region
    _
  $region5: #{_lambda_.1} parent=0 // pred_fallthru
    _
  // Predicated region
  $region6: #{_lambda_.1} parent=0 // pred_check
    _
  $region7: #{_lambda_.1} parent=0 // pred_check_branch
    %12 = sbr.rel (0) target = $region9
  $region8: #{_lambda_.1} parent=0 // pred_region
    _
  $region9: #{_lambda_.1} parent=0 // pred_fallthru
    _
  // Predicated region
  $region10: #{_lambda_.1} parent=0 // pred_check
    _
  $region11: #{_lambda_.1} parent=0 // pred_check_branch
    %14 = sbr.rel (0) target = $region13
  $region12: #{_lambda_.1} parent=0 // pred_region
    _
  $region13: #{_lambda_.1} parent=0 // pred_fallthru
    _
  // Predicated region
  $region14: #{_lambda_.1} parent=0 // pred_check
    _
  $region15: #{_lambda_.1} parent=0 // pred_check_branch
    %16 = sbr.rel (0) target = $region17
  $region16: #{_lambda_.1} parent=0 // pred_region
    _
  $region17: #{_lambda_.1} parent=0 // pred_fallthru
    _
  %v17 = vld [vmem:[%s2] sm:$0xff]
  %v18 = vld [vmem:[%s3] sm:$0xff]
  %vm19 = vcmp.ne.f32.partialorder %v18, 0.0
  %v20 = vsub.f32 0.0, %v17
  %v21 = vsel %vm19, %v20, %v17
  %v22 = vand.u32 2147483647, %v21
  %v23 = vsub.f32 0.0, %v22
  %v24 = vmul.f32 %v23, 1.442695
  %v25 = vpow.pop %v24
  %v26 = vmax.f32 %v21, 0.0
  %v27 = vadd.f32 %v25, 1.0
  %v28 = vlog2.pop %v27
  %v29 = vmul.f32 %v28, 0.6931472
  %v30 = vmul.f32 -0.5, %v25
  %v31 = vadd.f32 %v30, 1.0
  %v32 = vmul.f32 %v31, %v25
  %v33 = vand.u32 2147483647, %v25
  %vm34 = vcmp.lt.f32.partialorder %v33, 0.0004427343
  %v35 = vsel %vm34, %v32, %v29
  %v36 = vadd.f32 %v26, %v35
  %v37 = vld [vmem:[%s0] sm:$0x1]
  %v38 = vld [vmem:[%s1] sm:$0x1]
  %v40 = vlaneseq
  %v41 = vshrl.u32 %v40, 7
  %v42 = vsub.s32 0, %v41
  %v43 = vrot.slane %v37, %v42
  %v46 = vlaneseq
  %v47 = vshrl.u32 %v46, 7
  %v48 = vsub.s32 0, %v47
  %v49 = vrot.slane %v38, %v48
  %v51 = vsel %vm19, %v43, %v49
  %v52 = vadd.f32 %v25, 1.0
  %v53 = vrcp.pop %v52
  %vm54 = vcmp.ge.f32.partialorder %v21, 0.0
  %v55 = vmul.f32 %v25, %v53
  %v56 = vsel %vm54, %v53, %v55
  %v57 = vmul.f32 %v51, %v56
  %v58 = vmul.f32 %v57, %v36
  %v59 = vadd.f32 %v58, 0.0
  %60 = vst [vmem:[%s4] sm:$0xff] %v59
  // Predicated region
  $region18: #{_lambda_.1} parent=0 // pred_check
    _
  $region19: #{_lambda_.1} parent=0 // pred_check_branch
    %62 = sbr.rel (0) target = $region21
  $region20: #{_lambda_.1} parent=0 // pred_region
    _
  $region21: #{_lambda_.1} parent=0 // pred_fallthru
    _
  // Predicated region
  $region22: #{_lambda_.1} parent=0 // pred_check
    _
  $region23: #{_lambda_.1} parent=0 // pred_check_branch
    %64 = sbr.rel (0) target = $region25
  $region24: #{_lambda_.1} parent=0 // pred_region
    _
  $region25: #{_lambda_.1} parent=0 // pred_fallthru
    _

</llo_original>
